<compile_context>
chip_gen: v6e
topology: v6e:2x2x1
jax: 0.10.0
libtpu: 0.0.40
codegen_flags: <defaults>
</compile_context>

<pallas_src>
import functools

import jax
import jax.numpy as jnp
from jax.experimental import pallas as pl
from jax.experimental.pallas import tpu as pltpu


# -----------------------------------------------------------------------------
# Pallas kernel: fused MLP (4 x 1x1-conv) + ReLU + 2-class log_softmax.
# Layout inside the kernel: channels on sublanes, points on lanes.
# -----------------------------------------------------------------------------
def maskpred_kernel(x_ref,              # (Bb, Cp, tn)  pointfeat slab
                    ga_ref,             # (Bb, H1, 1)   per-batch folded bias (gfeat + BN), f32
                    wa_ref,             # (H1, Cp)      bf16
                    wb_ref, bb_ref,     # (H2, H1) bf16, (H2, 1) f32
                    wc_ref, bc_ref,     # (H3, H2) bf16, (H3, 1) f32
                    wd_ref, bd_ref,     # (2, H3)  bf16, (2, 1)  f32
                    o_ref):             # (Bb, 2, tn)   log-probabilities, f32
    # Weights/biases are grid-invariant; load once per step, outside the batch loop.
    wa = wa_ref[...]
    wb = wb_ref[...]
    wc = wc_ref[...]
    wd = wd_ref[...]
    bias_b = bb_ref[...]
    bias_c = bc_ref[...]
    bias_d = bd_ref[...]

    n_batch = x_ref.shape[0]            # static batch block size
    for b in range(n_batch):
        # bf16 MXU operands, f32 accumulation + f32 elementwise epilogues.
        x = x_ref[b].astype(jnp.bfloat16)                                   # (Cp, tn)

        # conva (pointfeat part) + per-batch gfeat/BN bias + relu
        h = jnp.dot(wa, x, preferred_element_type=jnp.float32) + ga_ref[b]  # (H1, tn) f32
        h = jnp.maximum(h, 0.0).astype(jnp.bfloat16)

        # convb + bnb + relu
        h = jnp.dot(wb, h, preferred_element_type=jnp.float32) + bias_b     # (H2, tn) f32
        h = jnp.maximum(h, 0.0).astype(jnp.bfloat16)

        # convc + bnc + relu
        h = jnp.dot(wc, h, preferred_element_type=jnp.float32) + bias_c     # (H3, tn) f32
        h = jnp.maximum(h, 0.0).astype(jnp.bfloat16)

        # convd (no BN, no relu) -> logits (2, tn)
        logits = jnp.dot(wd, h, preferred_element_type=jnp.float32) + bias_d

        # Two-class log_softmax over the sublane axis, one exp + one log:
        # lse = max(l0, l1) + log(1 + exp(-|l0 - l1|)); pure VPU/EUP work.
        l0 = logits[0:1, :]
        l1 = logits[1:2, :]
        m = jnp.maximum(l0, l1)
        lse = m + jnp.log(1.0 + jnp.exp(-jnp.abs(l0 - l1)))
        o_ref[b] = (logits - lse).astype(o_ref.dtype)


# -----------------------------------------------------------------------------
# Tiling helpers.
# -----------------------------------------------------------------------------
def _round_up(x, m):
    return (x + m - 1) // m * m


def _pick_tile(n, tn_max):
    """Point-axis tile (multiple of 128) + 128-padded point count.

    Pads the point axis up to a multiple of 128 and picks the largest
    128-multiple divisor of the padded length that is <= tn_max.  Never
    emits a single untiled block of an arbitrarily large N.
    """
    tn_max = max(128, (int(tn_max) // 128) * 128)
    n_pad = _round_up(n, 128)
    if n_pad <= tn_max:
        return n_pad, n_pad
    chunks = n_pad // 128
    best = 1
    for c in range(1, min(chunks, tn_max // 128) + 1):
        if chunks % c == 0:
            best = c
    return best * 128, n_pad


def _pick_bb(batch, n_point_tiles, tn, target_pts=2048):
    """Batch block size: pack batches per grid step when the point tile is
    small (amortize per-step overhead), but keep >= 2 grid blocks when
    possible so both v7x TensorCores get work."""
    want = max(1, target_pts // tn)
    divs = [d for d in range(1, batch + 1) if batch % d == 0]
    bb = max(d for d in divs if d <= want)
    while bb > 1 and n_point_tiles * (batch // bb) < 2:
        bb = max(d for d in divs if d < bb)
    return bb


# -----------------------------------------------------------------------------
# pallas_call wrapper.
# -----------------------------------------------------------------------------
def maskpred_pallas(pointfeat, gbias, params, *, tn=2048,
                    compute_dtype=jnp.bfloat16):
    """pointfeat: (B, Cp, N) f32 (or bf16 for half the HBM read),
    gbias: (B, H1, 1) f32 per-batch bias column.
    Returns (B, 2, N) f32 log-probabilities (channel-major)."""
    B, Cp, N = pointfeat.shape

    # bf16 operands -> single-pass MXU; the arrays are tiny so the cast is free.
    wa = params["wa_p"].astype(compute_dtype)
    wb = params["wb"].astype(compute_dtype)
    wc = params["wc"].astype(compute_dtype)
    wd = params["wd"].astype(compute_dtype)
    bbc = params["bb_col"].astype(jnp.float32)
    bcc = params["bc_col"].astype(jnp.float32)
    bdc = params["bd_col"].astype(jnp.float32)
    gbias = gbias.astype(jnp.float32)
    H1 = wa.shape[0]

    # Point-axis tiling (pad to a multiple of 128; tile is a 128-multiple).
    tn, n_pad = _pick_tile(N, tn)
    if n_pad != N:
        pointfeat = jnp.pad(pointfeat, ((0, 0), (0, 0), (0, n_pad - N)))
    grid_n = n_pad // tn

    # Batch blocking for the small-N regime.
    bb_blk = _pick_bb(B, grid_n, tn)
    # Point tiles outermost so the megacore-sharded axis has >= 2 blocks even
    # when B is 1 or odd (gbias re-fetch per step is only ~H1*4 bytes).
    grid = (grid_n, B // bb_blk)

    # Grid-invariant operands: constant index maps -> DMA'd once, stay resident.
    full = lambda arr: pl.BlockSpec(arr.shape, lambda n, b: (0,) * arr.ndim)

    out = pl.pallas_call(
        maskpred_kernel,
        out_shape=jax.ShapeDtypeStruct((B, 2, n_pad), jnp.float32),
        grid_spec=pltpu.PrefetchScalarGridSpec(
            num_scalar_prefetch=0,
            grid=grid,
            in_specs=[
                # pointfeat slab: Bb batches, all channels, tn points.
                pl.BlockSpec((bb_blk, Cp, tn), lambda n, b: (b, 0, n)),
                # per-batch first-layer bias columns.
                pl.BlockSpec((bb_blk, H1, 1), lambda n, b: (b, 0, 0)),
                full(wa),
                full(wb), full(bbc),
                full(wc), full(bcc),
                full(wd), full(bdc),
            ],
            out_specs=pl.BlockSpec((bb_blk, 2, tn), lambda n, b: (b, 0, n)),
        ),
        compiler_params=pltpu.CompilerParams(
            dimension_semantics=("parallel", "parallel"),
            vmem_limit_bytes=48 * 1024 * 1024),
    )(pointfeat, gbias, wa, wb, bbc, wc, bcc, wd, bdc)

    return out if n_pad == N else out[:, :, :N]


# -----------------------------------------------------------------------------
# Parameter construction (deterministic) + BN folding (eval mode).
# -----------------------------------------------------------------------------
def fold_bn(w, b, gamma, beta, mean, var, eps=1e-5):
    """Fold eval-mode BatchNorm1d into a 1x1 conv.  w: (Cout, Cin), b: (Cout,)."""
    s = gamma / jnp.sqrt(var + eps)
    return w * s[:, None], s * (b - mean) + beta


def make_params(key, pointfeat_dim, gfeat_dim, num_scales, mask_dim=2):
    C0 = pointfeat_dim + gfeat_dim * num_scales
    H1, H2, H3 = gfeat_dim // 2, gfeat_dim // 4, gfeat_dim // 8
    keys = jax.random.split(key, 11)

    def conv(kw, kb, cin, cout):
        w = jax.random.normal(kw, (cout, cin), jnp.float32) * 0.05
        b = jax.random.normal(kb, (cout,), jnp.float32) * 0.05
        return w, b

    def bn(k, c):
        kg, kb, km, kv = jax.random.split(k, 4)
        gamma = 1.0 + 0.1 * jax.random.normal(kg, (c,), jnp.float32)
        beta = 0.1 * jax.random.normal(kb, (c,), jnp.float32)
        mean = 0.1 * jax.random.normal(km, (c,), jnp.float32)
        var = jnp.abs(jax.random.normal(kv, (c,), jnp.float32)) + 0.5
        return gamma, beta, mean, var

    wa, ba = conv(keys[0], keys[1], C0, H1)
    wb, bb = conv(keys[2], keys[3], H1, H2)
    wc, bc = conv(keys[4], keys[5], H2, H3)
    wd, bd = conv(keys[6], keys[7], H3, mask_dim)

    wa_f, ba_f = fold_bn(wa, ba, *bn(keys[8], H1))
    wb_f, bb_f = fold_bn(wb, bb, *bn(keys[9], H2))
    wc_f, bc_f = fold_bn(wc, bc, *bn(keys[10], H3))

    # Channel-major (Cout, Cin) weights; conva split into pointfeat / gfeat
    # halves (torch concat order: pointfeat first).
    return {
        "wa_p": wa_f[:, :pointfeat_dim],          # (H1, Cp)
        "wa_g": wa_f[:, pointfeat_dim:],          # (H1, Cg*num_scales)
        "ba": ba_f,                               # (H1,)
        "wb": wb_f, "bb_col": bb_f[:, None],
        "wc": wc_f, "bc_col": bc_f[:, None],
        "wd": wd,   "bd_col": bd[:, None],
    }


# -----------------------------------------------------------------------------
# Wrapper reproducing MaskPredNet.forward glue (view / repeat / cat folded away).
# -----------------------------------------------------------------------------
def maskprednet_forward(pointfeat, gfeat, params, *, num_pts, num_scales,
                        tn=2048, channel_major=False):
    """pointfeat: (B, pointfeat_dim, N), gfeat: (B, gfeat_dim*num_scales) (or the
    torch-style (B*num_scales, gfeat_dim)).  Returns (B, N, 2) log-probs
    (or channel-major (B, 2, N) if channel_major=True)."""
    B, Cp, N = pointfeat.shape
    assert N == num_pts * num_scales
    G = gfeat.shape[1]

    # Mirrors torch: gfeat.view(-1, gfeat_dim * num_scales, 1).repeat(...)
    gf = gfeat.reshape(-1, G * num_scales).astype(jnp.float32)
    assert gf.shape[0] == B

    # The repeated-gfeat part of conva collapses to a per-batch bias column:
    # (B, Cg) @ (Cg, H1) -> (B, H1, 1).  Tiny; stays in the JAX wrapper, f32.
    gbias = (gf @ params["wa_g"].T + params["ba"])[:, :, None]

    out = maskpred_pallas(pointfeat, gbias, params, tn=tn)   # (B, 2, N)
    if channel_major:
        return out                                           # lane-dense, no transpose
    # transpose(2,1) of the PyTorch module (tiny, 8 bytes/point).
    return jnp.transpose(out, (0, 2, 1))                     # (B, N, 2)


def maskprednet_reference(pointfeat, gfeat, params, *, num_scales,
                          compute_dtype=jnp.bfloat16):
    """Pure-JAX reference mirroring the kernel's bf16-operand / f32-accumulate
    precision (the original module is f32; eval-mode BN folded identically)."""
    B, Cp, N = pointfeat.shape
    gf = gfeat.reshape(B, -1).astype(jnp.float32)
    ga = (gf @ params["wa_g"].T + params["ba"])[:, :, None]      # (B, H1, 1)

    def mm(w, x):  # (Cout, Cin) contracted with (B, Cin, N) -> (B, Cout, N) f32
        return jnp.einsum("oc,bcn->bon", w.astype(compute_dtype),
                          x.astype(compute_dtype),
                          preferred_element_type=jnp.float32)

    h = jnp.maximum(mm(params["wa_p"], pointfeat) + ga, 0.0)
    h = jnp.maximum(mm(params["wb"], h) + params["bb_col"][None], 0.0)
    h = jnp.maximum(mm(params["wc"], h) + params["bc_col"][None], 0.0)
    logits = mm(params["wd"], h) + params["bd_col"][None]
    return jnp.transpose(jax.nn.log_softmax(logits, axis=1), (0, 2, 1))


if __name__ == "__main__":
    # Small, module-consistent shapes (num_pts matches the module default).
    B = 2
    num_pts = 256
    num_scales = 1
    pointfeat_dim = 64
    gfeat_dim = 256
    N = num_pts * num_scales

    key = jax.random.PRNGKey(0)
    k_pf, k_gf, k_par = jax.random.split(key, 3)

    pointfeat = jax.random.normal(k_pf, (B, pointfeat_dim, N), jnp.float32)
    gfeat = jax.random.normal(k_gf, (B, gfeat_dim * num_scales), jnp.float32)
    params = make_params(k_par, pointfeat_dim, gfeat_dim, num_scales)

    fwd = jax.jit(functools.partial(maskprednet_forward,
                                    num_pts=num_pts, num_scales=num_scales))
    mask = jax.block_until_ready(fwd(pointfeat, gfeat, params))

    ref = maskprednet_reference(pointfeat, gfeat, params, num_scales=num_scales)
    assert mask.shape == (B, N, 2)
    err = float(jnp.max(jnp.abs(mask - ref)))
    assert jnp.allclose(mask, ref, atol=1e-2, rtol=1e-2), err

    print("KERNEL_OK")
</pallas_src>

<mosaic_0001>
module attributes {stable_mosaic.version = 11 : i64} {
  func.func @maskpred_kernel(%arg0: i32, %arg1: i32, %arg2: memref<1x64x256xf32, #tpu.memory_space<vmem>>, %arg3: memref<1x128x1xf32, #tpu.memory_space<vmem>>, %arg4: memref<128x64xbf16, #tpu.memory_space<vmem>>, %arg5: memref<64x128xbf16, #tpu.memory_space<vmem>>, %arg6: memref<64x1xf32, #tpu.memory_space<vmem>>, %arg7: memref<32x64xbf16, #tpu.memory_space<vmem>>, %arg8: memref<32x1xf32, #tpu.memory_space<vmem>>, %arg9: memref<2x32xbf16, #tpu.memory_space<vmem>>, %arg10: memref<2x1xf32, #tpu.memory_space<vmem>>, %arg11: memref<1x2x256xf32, #tpu.memory_space<vmem>>) attributes {dimension_semantics = [#tpu.dimension_semantics<parallel>, #tpu.dimension_semantics<parallel>], iteration_bounds = array<i64: 1, 2>, scalar_prefetch = 0 : i64, scratch_operands = 0 : i64, tpu.core_type = #tpu.core_type<tc>, window_params = [{transform_indices = @transform_0, window_bounds = array<i64: 1, 64, 256>}, {transform_indices = @transform_1, window_bounds = array<i64: 1, 128, 1>}, {pipeline_mode = #tpu.pipeline_mode<synchronous>, transform_indices = @transform_2, window_bounds = array<i64: 128, 64>}, {pipeline_mode = #tpu.pipeline_mode<synchronous>, transform_indices = @transform_3, window_bounds = array<i64: 64, 128>}, {pipeline_mode = #tpu.pipeline_mode<synchronous>, transform_indices = @transform_4, window_bounds = array<i64: 64, 1>}, {pipeline_mode = #tpu.pipeline_mode<synchronous>, transform_indices = @transform_5, window_bounds = array<i64: 32, 64>}, {pipeline_mode = #tpu.pipeline_mode<synchronous>, transform_indices = @transform_6, window_bounds = array<i64: 32, 1>}, {pipeline_mode = #tpu.pipeline_mode<synchronous>, transform_indices = @transform_7, window_bounds = array<i64: 2, 32>}, {pipeline_mode = #tpu.pipeline_mode<synchronous>, transform_indices = @transform_8, window_bounds = array<i64: 2, 1>}, {transform_indices = @transform_9, window_bounds = array<i64: 1, 2, 256>}]} {
    %c0 = arith.constant 0 : index
    %c0_0 = arith.constant 0 : index
    %0 = vector.load %arg4[%c0, %c0_0] : memref<128x64xbf16, #tpu.memory_space<vmem>>, vector<128x64xbf16>
    %c0_1 = arith.constant 0 : index
    %c0_2 = arith.constant 0 : index
    %1 = vector.load %arg5[%c0_1, %c0_2] : memref<64x128xbf16, #tpu.memory_space<vmem>>, vector<64x128xbf16>
    %c0_3 = arith.constant 0 : index
    %c0_4 = arith.constant 0 : index
    %2 = vector.load %arg7[%c0_3, %c0_4] : memref<32x64xbf16, #tpu.memory_space<vmem>>, vector<32x64xbf16>
    %c0_5 = arith.constant 0 : index
    %c0_6 = arith.constant 0 : index
    %3 = vector.load %arg9[%c0_5, %c0_6] : memref<2x32xbf16, #tpu.memory_space<vmem>>, vector<2x32xbf16>
    %c0_7 = arith.constant 0 : index
    %c0_8 = arith.constant 0 : index
    %4 = vector.load %arg6[%c0_7, %c0_8] : memref<64x1xf32, #tpu.memory_space<vmem>>, vector<64x1xf32>
    %c0_9 = arith.constant 0 : index
    %c0_10 = arith.constant 0 : index
    %5 = vector.load %arg8[%c0_9, %c0_10] : memref<32x1xf32, #tpu.memory_space<vmem>>, vector<32x1xf32>
    %c0_11 = arith.constant 0 : index
    %c0_12 = arith.constant 0 : index
    %6 = vector.load %arg10[%c0_11, %c0_12] : memref<2x1xf32, #tpu.memory_space<vmem>>, vector<2x1xf32>
    %c0_13 = arith.constant 0 : index
    %c0_14 = arith.constant 0 : index
    %c0_15 = arith.constant 0 : index
    %7 = vector.load %arg2[%c0_13, %c0_14, %c0_15] : memref<1x64x256xf32, #tpu.memory_space<vmem>>, vector<1x64x256xf32>
    %8 = vector.shape_cast %7 : vector<1x64x256xf32> to vector<64x256xf32>
    %9 = arith.truncf %8 : vector<64x256xf32> to vector<64x256xbf16>
    %cst = arith.constant dense<0.000000e+00> : vector<128x256xf32>
    %10 = tpu.matmul %0, %9, %cst {dimension_numbers = #tpu.dot_dimension_numbers<[1], [0], [0], [1], [0, 0, 1, 1], [], []>} : vector<128x64xbf16>, vector<64x256xbf16>, vector<128x256xf32> -> vector<128x256xf32>
    %c0_16 = arith.constant 0 : index
    %c0_17 = arith.constant 0 : index
    %c0_18 = arith.constant 0 : index
    %11 = vector.load %arg3[%c0_16, %c0_17, %c0_18] : memref<1x128x1xf32, #tpu.memory_space<vmem>>, vector<1x128x1xf32>
    %12 = vector.shape_cast %11 : vector<1x128x1xf32> to vector<128x1xf32>
    %13 = vector.broadcast %12 : vector<128x1xf32> to vector<128x256xf32>
    %14 = arith.addf %10, %13 : vector<128x256xf32>
    %cst_19 = arith.constant 0.000000e+00 : f32
    %15 = vector.broadcast %cst_19 : f32 to vector<128x256xf32>
    %16 = arith.maximumf %14, %15 : vector<128x256xf32>
    %17 = arith.truncf %16 : vector<128x256xf32> to vector<128x256xbf16>
    %cst_20 = arith.constant dense<0.000000e+00> : vector<64x256xf32>
    %18 = tpu.matmul %1, %17, %cst_20 {dimension_numbers = #tpu.dot_dimension_numbers<[1], [0], [0], [1], [0, 0, 1, 1], [], []>} : vector<64x128xbf16>, vector<128x256xbf16>, vector<64x256xf32> -> vector<64x256xf32>
    %19 = vector.broadcast %4 : vector<64x1xf32> to vector<64x256xf32>
    %20 = arith.addf %18, %19 : vector<64x256xf32>
    %cst_21 = arith.constant 0.000000e+00 : f32
    %21 = vector.broadcast %cst_21 : f32 to vector<64x256xf32>
    %22 = arith.maximumf %20, %21 : vector<64x256xf32>
    %23 = arith.truncf %22 : vector<64x256xf32> to vector<64x256xbf16>
    %cst_22 = arith.constant dense<0.000000e+00> : vector<32x256xf32>
    %24 = tpu.matmul %2, %23, %cst_22 {dimension_numbers = #tpu.dot_dimension_numbers<[1], [0], [0], [1], [0, 0, 1, 1], [], []>} : vector<32x64xbf16>, vector<64x256xbf16>, vector<32x256xf32> -> vector<32x256xf32>
    %25 = vector.broadcast %5 : vector<32x1xf32> to vector<32x256xf32>
    %26 = arith.addf %24, %25 : vector<32x256xf32>
    %cst_23 = arith.constant 0.000000e+00 : f32
    %27 = vector.broadcast %cst_23 : f32 to vector<32x256xf32>
    %28 = arith.maximumf %26, %27 : vector<32x256xf32>
    %29 = arith.truncf %28 : vector<32x256xf32> to vector<32x256xbf16>
    %cst_24 = arith.constant dense<0.000000e+00> : vector<2x256xf32>
    %30 = tpu.matmul %3, %29, %cst_24 {dimension_numbers = #tpu.dot_dimension_numbers<[1], [0], [0], [1], [0, 0, 1, 1], [], []>} : vector<2x32xbf16>, vector<32x256xbf16>, vector<2x256xf32> -> vector<2x256xf32>
    %31 = vector.broadcast %6 : vector<2x1xf32> to vector<2x256xf32>
    %32 = arith.addf %30, %31 : vector<2x256xf32>
    %33 = vector.extract_strided_slice %32 {offsets = [0, 0], sizes = [1, 256], strides = [1, 1]} : vector<2x256xf32> to vector<1x256xf32>
    %34 = vector.extract_strided_slice %32 {offsets = [1, 0], sizes = [1, 256], strides = [1, 1]} : vector<2x256xf32> to vector<1x256xf32>
    %35 = arith.maximumf %33, %34 : vector<1x256xf32>
    %36 = arith.subf %33, %34 : vector<1x256xf32>
    %37 = math.absf %36 : vector<1x256xf32>
    %cst_25 = arith.constant 0.000000e+00 : f32
    %38 = vector.broadcast %cst_25 : f32 to vector<1x256xf32>
    %39 = arith.subf %38, %37 : vector<1x256xf32>
    %40 = math.exp %39 : vector<1x256xf32>
    %cst_26 = arith.constant 1.000000e+00 : f32
    %41 = vector.broadcast %cst_26 : f32 to vector<1x256xf32>
    %42 = arith.addf %41, %40 : vector<1x256xf32>
    %43 = math.log %42 : vector<1x256xf32>
    %44 = arith.addf %35, %43 : vector<1x256xf32>
    %45 = vector.broadcast %44 : vector<1x256xf32> to vector<2x256xf32>
    %46 = arith.subf %32, %45 : vector<2x256xf32>
    %c0_27 = arith.constant 0 : index
    %c0_28 = arith.constant 0 : index
    %c0_29 = arith.constant 0 : index
    %47 = vector.load %arg11[%c0_27, %c0_28, %c0_29] : memref<1x2x256xf32, #tpu.memory_space<vmem>>, vector<1x2x256xf32>
    %48 = vector.shape_cast %47 : vector<1x2x256xf32> to vector<2x256xf32>
    %49 = vector.shape_cast %46 : vector<2x256xf32> to vector<1x2x256xf32>
    tpu.vector_store %arg11[%c0_27, %c0_28, %c0_29], %49 {strides = array<i32>} : memref<1x2x256xf32, #tpu.memory_space<vmem>>, vector<1x2x256xf32>,
    return
  }
  func.func @transform_0(%arg0: i32, %arg1: i32) -> (i32, i32, i32) {
    %c0_i32 = arith.constant 0 : i32
    %c0_i32_0 = arith.constant 0 : i32
    return %arg1, %c0_i32, %arg0 : i32, i32, i32
  }
  func.func @transform_1(%arg0: i32, %arg1: i32) -> (i32, i32, i32) {
    %c0_i32 = arith.constant 0 : i32
    %c0_i32_0 = arith.constant 0 : i32
    %c0_i32_1 = arith.constant 0 : i32
    return %arg1, %c0_i32, %c0_i32_0 : i32, i32, i32
  }
  func.func @transform_2(%arg0: i32, %arg1: i32) -> (i32, i32) {
    %c0_i32 = arith.constant 0 : i32
    %c0_i32_0 = arith.constant 0 : i32
    %c0_i32_1 = arith.constant 0 : i32
    return %c0_i32, %c0_i32_0 : i32, i32
  }
  func.func @transform_3(%arg0: i32, %arg1: i32) -> (i32, i32) {
    %c0_i32 = arith.constant 0 : i32
    %c0_i32_0 = arith.constant 0 : i32
    %c0_i32_1 = arith.constant 0 : i32
    return %c0_i32, %c0_i32_0 : i32, i32
  }
  func.func @transform_4(%arg0: i32, %arg1: i32) -> (i32, i32) {
    %c0_i32 = arith.constant 0 : i32
    %c0_i32_0 = arith.constant 0 : i32
    %c0_i32_1 = arith.constant 0 : i32
    return %c0_i32, %c0_i32_0 : i32, i32
  }
  func.func @transform_5(%arg0: i32, %arg1: i32) -> (i32, i32) {
    %c0_i32 = arith.constant 0 : i32
    %c0_i32_0 = arith.constant 0 : i32
    %c0_i32_1 = arith.constant 0 : i32
    return %c0_i32, %c0_i32_0 : i32, i32
  }
  func.func @transform_6(%arg0: i32, %arg1: i32) -> (i32, i32) {
    %c0_i32 = arith.constant 0 : i32
    %c0_i32_0 = arith.constant 0 : i32
    %c0_i32_1 = arith.constant 0 : i32
    return %c0_i32, %c0_i32_0 : i32, i32
  }
  func.func @transform_7(%arg0: i32, %arg1: i32) -> (i32, i32) {
    %c0_i32 = arith.constant 0 : i32
    %c0_i32_0 = arith.constant 0 : i32
    %c0_i32_1 = arith.constant 0 : i32
    return %c0_i32, %c0_i32_0 : i32, i32
  }
  func.func @transform_8(%arg0: i32, %arg1: i32) -> (i32, i32) {
    %c0_i32 = arith.constant 0 : i32
    %c0_i32_0 = arith.constant 0 : i32
    %c0_i32_1 = arith.constant 0 : i32
    return %c0_i32, %c0_i32_0 : i32, i32
  }
  func.func @transform_9(%arg0: i32, %arg1: i32) -> (i32, i32, i32) {
    %c0_i32 = arith.constant 0 : i32
    %c0_i32_0 = arith.constant 0 : i32
    return %arg1, %c0_i32, %arg0 : i32, i32, i32
  }
}

</mosaic_0001>

<llo_original>
// kernel: maskprednet_forward.1
$region0: #{maskprednet_forward.1}
  #allocation0 [shape = 'u32[]', space=smem, size = 0x4, offset = 0x4, fixed_abs, tag = 'smem constant byte address 0x4 - core index']
  #allocation1 [shape = 'u32[144,128]{1,0:T(1,128)}', space=vmem, size = 0x12000, scoped, tag = 'internal scratch']
  %s0 = inlined_call_operand.vmem [shape: f32[2,64,256], index: 0, kind: input, shape index: {}]
  %s1 = inlined_call_operand.vmem [shape: f32[2,128,1], index: 1, kind: input, shape index: {}]
  %s2 = inlined_call_operand.vmem [shape: bf16[128,64], index: 2, kind: input, shape index: {}]
  %s3 = inlined_call_operand.vmem [shape: bf16[64,128], index: 3, kind: input, shape index: {}]
  %s4 = inlined_call_operand.vmem [shape: f32[64,1], index: 4, kind: input, shape index: {}]
  %s5 = inlined_call_operand.vmem [shape: bf16[32,64], index: 5, kind: input, shape index: {}]
  %s6 = inlined_call_operand.vmem [shape: f32[32,1], index: 6, kind: input, shape index: {}]
  %s7 = inlined_call_operand.vmem [shape: bf16[2,32], index: 7, kind: input, shape index: {}]
  %s8 = inlined_call_operand.vmem [shape: f32[2,1], index: 8, kind: input, shape index: {}]
  %s9 = inlined_call_operand.hbm [shape: f32[2,2,256], index: 9, kind: output, shape index: {}]
  %s10 = sld [smem:[#allocation0]]
  $region69: #{maskprednet_forward.1} parent=0
    _
  %s12 = ssub.s32 1, %s10
  %s13 = scalar_select 0, %s12, %s10
  $region1: #{maskprednet_forward.1} parent=0
    #allocation2 [shape = 'u8[4096]{0}', space=vmem, size = 0x1000, scoped, tag = 'output window, operand 0']
    #allocation3 [shape = 's32[2]{0}', space=sflag, size = 0x8, scoped, tag = 'scoped memory for maskprednet_forward.1']
    %14 = vsyncpa [#allocation3], 0
    %s15 = scalar_lea.sflag [#allocation3], 1
    %16 = vsyncpa %s15, 0
    loop: start=0, step=1, limit=4
    $region2: #{maskprednet_forward.1} parent=1 // loop_pre_header
      _
    $region3: #{maskprednet_forward.1} parent=1 // loop_header
      %s18 = sphi 0, %s22
      %p19 = scmp.ge.s32.totalorder %s18, 4
      %s25 = sphi 0, %s37
      %s26 = sphi 0, %s33
      %s27 = sphi 0, %s25
      %s28 = sphi 0, %s26
      %s29 = sphi 0, %s27
      %s30 = sphi 0, %s28
      %s42 = sphi 0, %s44
      %s45 = sphi 0, %s42
      %s46 = sphi 0, %s45
      %s62 = sphi 0, %s46
      %s68 = sphi 0, %s70
      %s71 = sphi 0, %s68
      %s72 = sphi 0, %s71
      %s88 = sphi 0, %s72
      %s92 = sphi 0, %s92
      %s94 = sphi 0, %s92
      %s95 = sphi 0, %s94
      %s109 = sphi 0, %s95
      %s113 = sphi 0, %s113
      %s115 = sphi 0, %s113
      %s116 = sphi 0, %s115
      %s130 = sphi 0, %s116
      %s134 = sphi 0, %s134
      %s136 = sphi 0, %s134
      %s137 = sphi 0, %s136
      %s151 = sphi 0, %s137
      %s155 = sphi 0, %s155
      %s157 = sphi 0, %s155
      %s158 = sphi 0, %s157
      %s172 = sphi 0, %s158
      %s176 = sphi 0, %s176
      %s178 = sphi 0, %s176
      %s179 = sphi 0, %s178
      %s193 = sphi 0, %s179
      %s197 = sphi 0, %s197
      %s199 = sphi 0, %s197
      %s200 = sphi 0, %s199
      %s214 = sphi 0, %s200
      %s218 = sphi 0, %s218
      %s220 = sphi 0, %s218
      %s221 = sphi 0, %s220
      %s235 = sphi 0, %s221
      %s243 = sphi 0, %s245
      %s246 = sphi 0, %s243
      %s247 = sphi 0, %s246
      %s263 = sphi 0, %s247
    $region4: #{maskprednet_forward.1} parent=1 // loop_header_branch
      %21 = sbr.rel (%p19) target = $region8
    $region5: #{maskprednet_forward.1} parent=1 // loop_body
      %s23 = ssub.s32 %s18, 1
      %s24 = ssub.s32 %s18, 2
      %s31 = sadd.s32 1, %s26
      %p32 = scmp.ge.s32.totalorder %s31, 2
      %s33 = scalar_select %p32, 0, %s31
      %s34 = sadd.s32 1, %s25
      %s35 = scalar_select %p32, %s34, %s25
      %p36 = scmp.ge.s32.totalorder %s35, 1
      %s37 = scalar_select %p36, 0, %s35
      %s38 = ssub.s32 %s26, %s33
      %s39 = ssub.s32 %s25, %s37
      %s40 = sor.u32 %s38, %s39
      %p41 = scmp.eq.s32.totalorder %s40, 0
      %s43 = sadd.s32 %s42, 1
      %s44 = scalar_select %p41, %s42, %s43
      %p47 = pneg %p41
      %p48 = scmp.eq.s32.totalorder %s18, 1
      %p49 = por %p47, %p48
      %p50 = scmp.ne.s32.totalorder %s42, %s45
      %p51 = scmp.eq.s32.totalorder %s18, 0
      %p52 = por %p50, %p51
      %p53 = scmp.ne.s32.totalorder %s42, %s45
      %p54 = scmp.eq.s32.totalorder %s23, 1
      %p55 = por %p53, %p54
      %p56 = scmp.ne.s32.totalorder %s45, %s46
      %p57 = scmp.eq.s32.totalorder %s23, 0
      %p58 = por %p56, %p57
      %p59 = scmp.ne.s32.totalorder %s45, %s46
      %p60 = scmp.eq.s32.totalorder %s24, 1
      %p61 = por %p59, %p60
      %p63 = scmp.ne.s32.totalorder %s46, %s62
      %p64 = scmp.eq.s32.totalorder %s24, 0
      %p65 = por %p63, %p64
      %s66 = ssub.s32 %s26, %s33
      %p67 = scmp.eq.s32.totalorder %s66, 0
      %s69 = sadd.s32 %s68, 1
      %s70 = scalar_select %p67, %s68, %s69
      %p73 = pneg %p67
      %p74 = scmp.eq.s32.totalorder %s18, 1
      %p75 = por %p73, %p74
      %p76 = scmp.ne.s32.totalorder %s68, %s71
      %p77 = scmp.eq.s32.totalorder %s18, 0
      %p78 = por %p76, %p77
      %p79 = scmp.ne.s32.totalorder %s68, %s71
      %p80 = scmp.eq.s32.totalorder %s23, 1
      %p81 = por %p79, %p80
      %p82 = scmp.ne.s32.totalorder %s71, %s72
      %p83 = scmp.eq.s32.totalorder %s23, 0
      %p84 = por %p82, %p83
      %p85 = scmp.ne.s32.totalorder %s71, %s72
      %p86 = scmp.eq.s32.totalorder %s24, 1
      %p87 = por %p85, %p86
      %p89 = scmp.ne.s32.totalorder %s72, %s88
      %p90 = scmp.eq.s32.totalorder %s24, 0
      %p91 = por %p89, %p90
      %s93 = sadd.s32 %s92, 1
      %p96 = scmp.eq.s32.totalorder %s18, 1
      %p97 = scmp.ne.s32.totalorder %s92, %s94
      %p98 = scmp.eq.s32.totalorder %s18, 0
      %p99 = por %p97, %p98
      %p100 = scmp.ne.s32.totalorder %s92, %s94
      %p101 = scmp.eq.s32.totalorder %s23, 1
      %p102 = por %p100, %p101
      %p103 = scmp.ne.s32.totalorder %s94, %s95
      %p104 = scmp.eq.s32.totalorder %s23, 0
      %p105 = por %p103, %p104
      %p106 = scmp.ne.s32.totalorder %s94, %s95
      %p107 = scmp.eq.s32.totalorder %s24, 1
      %p108 = por %p106, %p107
      %p110 = scmp.ne.s32.totalorder %s95, %s109
      %p111 = scmp.eq.s32.totalorder %s24, 0
      %p112 = por %p110, %p111
      %s114 = sadd.s32 %s113, 1
      %p117 = scmp.eq.s32.totalorder %s18, 1
      %p118 = scmp.ne.s32.totalorder %s113, %s115
      %p119 = scmp.eq.s32.totalorder %s18, 0
      %p120 = por %p118, %p119
      %p121 = scmp.ne.s32.totalorder %s113, %s115
      %p122 = scmp.eq.s32.totalorder %s23, 1
      %p123 = por %p121, %p122
      %p124 = scmp.ne.s32.totalorder %s115, %s116
      %p125 = scmp.eq.s32.totalorder %s23, 0
      %p126 = por %p124, %p125
      %p127 = scmp.ne.s32.totalorder %s115, %s116
      %p128 = scmp.eq.s32.totalorder %s24, 1
      %p129 = por %p127, %p128
      %p131 = scmp.ne.s32.totalorder %s116, %s130
      %p132 = scmp.eq.s32.totalorder %s24, 0
      %p133 = por %p131, %p132
      %s135 = sadd.s32 %s134, 1
      %p138 = scmp.eq.s32.totalorder %s18, 1
      %p139 = scmp.ne.s32.totalorder %s134, %s136
      %p140 = scmp.eq.s32.totalorder %s18, 0
      %p141 = por %p139, %p140
      %p142 = scmp.ne.s32.totalorder %s134, %s136
      %p143 = scmp.eq.s32.totalorder %s23, 1
      %p144 = por %p142, %p143
      %p145 = scmp.ne.s32.totalorder %s136, %s137
      %p146 = scmp.eq.s32.totalorder %s23, 0
      %p147 = por %p145, %p146
      %p148 = scmp.ne.s32.totalorder %s136, %s137
      %p149 = scmp.eq.s32.totalorder %s24, 1
      %p150 = por %p148, %p149
      %p152 = scmp.ne.s32.totalorder %s137, %s151
      %p153 = scmp.eq.s32.totalorder %s24, 0
      %p154 = por %p152, %p153
      %s156 = sadd.s32 %s155, 1
      %p159 = scmp.eq.s32.totalorder %s18, 1
      %p160 = scmp.ne.s32.totalorder %s155, %s157
      %p161 = scmp.eq.s32.totalorder %s18, 0
      %p162 = por %p160, %p161
      %p163 = scmp.ne.s32.totalorder %s155, %s157
      %p164 = scmp.eq.s32.totalorder %s23, 1
      %p165 = por %p163, %p164
      %p166 = scmp.ne.s32.totalorder %s157, %s158
      %p167 = scmp.eq.s32.totalorder %s23, 0
      %p168 = por %p166, %p167
      %p169 = scmp.ne.s32.totalorder %s157, %s158
      %p170 = scmp.eq.s32.totalorder %s24, 1
      %p171 = por %p169, %p170
      %p173 = scmp.ne.s32.totalorder %s158, %s172
      %p174 = scmp.eq.s32.totalorder %s24, 0
      %p175 = por %p173, %p174
      %s177 = sadd.s32 %s176, 1
      %p180 = scmp.eq.s32.totalorder %s18, 1
      %p181 = scmp.ne.s32.totalorder %s176, %s178
      %p182 = scmp.eq.s32.totalorder %s18, 0
      %p183 = por %p181, %p182
      %p184 = scmp.ne.s32.totalorder %s176, %s178
      %p185 = scmp.eq.s32.totalorder %s23, 1
      %p186 = por %p184, %p185
      %p187 = scmp.ne.s32.totalorder %s178, %s179
      %p188 = scmp.eq.s32.totalorder %s23, 0
      %p189 = por %p187, %p188
      %p190 = scmp.ne.s32.totalorder %s178, %s179
      %p191 = scmp.eq.s32.totalorder %s24, 1
      %p192 = por %p190, %p191
      %p194 = scmp.ne.s32.totalorder %s179, %s193
      %p195 = scmp.eq.s32.totalorder %s24, 0
      %p196 = por %p194, %p195
      %s198 = sadd.s32 %s197, 1
      %p201 = scmp.eq.s32.totalorder %s18, 1
      %p202 = scmp.ne.s32.totalorder %s197, %s199
      %p203 = scmp.eq.s32.totalorder %s18, 0
      %p204 = por %p202, %p203
      %p205 = scmp.ne.s32.totalorder %s197, %s199
      %p206 = scmp.eq.s32.totalorder %s23, 1
      %p207 = por %p205, %p206
      %p208 = scmp.ne.s32.totalorder %s199, %s200
      %p209 = scmp.eq.s32.totalorder %s23, 0
      %p210 = por %p208, %p209
      %p211 = scmp.ne.s32.totalorder %s199, %s200
      %p212 = scmp.eq.s32.totalorder %s24, 1
      %p213 = por %p211, %p212
      %p215 = scmp.ne.s32.totalorder %s200, %s214
      %p216 = scmp.eq.s32.totalorder %s24, 0
      %p217 = por %p215, %p216
      %s219 = sadd.s32 %s218, 1
      %p222 = scmp.eq.s32.totalorder %s18, 1
      %p223 = scmp.ne.s32.totalorder %s218, %s220
      %p224 = scmp.eq.s32.totalorder %s18, 0
      %p225 = por %p223, %p224
      %p226 = scmp.ne.s32.totalorder %s218, %s220
      %p227 = scmp.eq.s32.totalorder %s23, 1
      %p228 = por %p226, %p227
      %p229 = scmp.ne.s32.totalorder %s220, %s221
      %p230 = scmp.eq.s32.totalorder %s23, 0
      %p231 = por %p229, %p230
      %p232 = scmp.ne.s32.totalorder %s220, %s221
      %p233 = scmp.eq.s32.totalorder %s24, 1
      %p234 = por %p232, %p233
      %p236 = scmp.ne.s32.totalorder %s221, %s235
      %p237 = scmp.eq.s32.totalorder %s24, 0
      %p238 = por %p236, %p237
      %s239 = ssub.s32 %s26, %s33
      %s240 = ssub.s32 %s25, %s37
      %s241 = sor.u32 %s239, %s240
      %p242 = scmp.eq.s32.totalorder %s241, 0
      %s244 = sadd.s32 %s243, 1
      %s245 = scalar_select %p242, %s243, %s244
      %p248 = pneg %p242
      %p249 = scmp.eq.s32.totalorder %s18, 1
      %p250 = por %p248, %p249
      %p251 = scmp.ne.s32.totalorder %s243, %s246
      %p252 = scmp.eq.s32.totalorder %s18, 0
      %p253 = por %p251, %p252
      %p254 = scmp.ne.s32.totalorder %s243, %s246
      %p255 = scmp.eq.s32.totalorder %s23, 1
      %p256 = por %p254, %p255
      %p257 = scmp.ne.s32.totalorder %s246, %s247
      %p258 = scmp.eq.s32.totalorder %s23, 0
      %p259 = por %p257, %p258
      %p260 = scmp.ne.s32.totalorder %s246, %s247
      %p261 = scmp.eq.s32.totalorder %s24, 1
      %p262 = por %p260, %p261
      %p264 = scmp.ne.s32.totalorder %s247, %s263
      %p265 = scmp.eq.s32.totalorder %s24, 0
      %p266 = por %p264, %p265
      %p267 = scmp.le.s32.totalorder 1, %s18
      %p268 = scmp.lt.s32.totalorder %s18, 3
      %p269 = pnand %p267, %p268
      %p270 = pneg %p269
      // Predicated region
      $region9: #{maskprednet_forward.1} parent=5 // pred_check
        _
      $region10: #{maskprednet_forward.1} parent=5 // pred_check_branch
        %272 = sbr.rel (%p269) target = $region12
      $region11: #{maskprednet_forward.1} parent=5 // pred_region
        %s273 = ssub.s32 %s18, 1
        // Predicated region
        $region13: #{maskprednet_forward.1} parent=11 // pred_check
          %p274 = pneg %p105
        $region14: #{maskprednet_forward.1} parent=11 // pred_check_branch
          %276 = sbr.rel (%p274) target = $region16
        $region15: #{maskprednet_forward.1} parent=11 // pred_region
          _
        $region16: #{maskprednet_forward.1} parent=11 // pred_fallthru
          _
        // Predicated region
        $region17: #{maskprednet_forward.1} parent=11 // pred_check
          %p277 = pneg %p126
        $region18: #{maskprednet_forward.1} parent=11 // pred_check_branch
          %279 = sbr.rel (%p277) target = $region20
        $region19: #{maskprednet_forward.1} parent=11 // pred_region
          _
        $region20: #{maskprednet_forward.1} parent=11 // pred_fallthru
          _
        // Predicated region
        $region21: #{maskprednet_forward.1} parent=11 // pred_check
          %p280 = pneg %p147
        $region22: #{maskprednet_forward.1} parent=11 // pred_check_branch
          %282 = sbr.rel (%p280) target = $region24
        $region23: #{maskprednet_forward.1} parent=11 // pred_region
          _
        $region24: #{maskprednet_forward.1} parent=11 // pred_fallthru
          _
        // Predicated region
        $region25: #{maskprednet_forward.1} parent=11 // pred_check
          %p283 = pneg %p168
        $region26: #{maskprednet_forward.1} parent=11 // pred_check_branch
          %285 = sbr.rel (%p283) target = $region28
        $region27: #{maskprednet_forward.1} parent=11 // pred_region
          _
        $region28: #{maskprednet_forward.1} parent=11 // pred_fallthru
          _
        // Predicated region
        $region29: #{maskprednet_forward.1} parent=11 // pred_check
          %p286 = pneg %p189
        $region30: #{maskprednet_forward.1} parent=11 // pred_check_branch
          %288 = sbr.rel (%p286) target = $region32
        $region31: #{maskprednet_forward.1} parent=11 // pred_region
          _
        $region32: #{maskprednet_forward.1} parent=11 // pred_fallthru
          _
        // Predicated region
        $region33: #{maskprednet_forward.1} parent=11 // pred_check
          %p289 = pneg %p210
        $region34: #{maskprednet_forward.1} parent=11 // pred_check_branch
          %291 = sbr.rel (%p289) target = $region36
        $region35: #{maskprednet_forward.1} parent=11 // pred_region
          _
        $region36: #{maskprednet_forward.1} parent=11 // pred_fallthru
          _
        // Predicated region
        $region37: #{maskprednet_forward.1} parent=11 // pred_check
          %p292 = pneg %p231
        $region38: #{maskprednet_forward.1} parent=11 // pred_check_branch
          %294 = sbr.rel (%p292) target = $region40
        $region39: #{maskprednet_forward.1} parent=11 // pred_region
          _
        $region40: #{maskprednet_forward.1} parent=11 // pred_fallthru
          _
      $region12: #{maskprednet_forward.1} parent=5 // pred_fallthru
        _
      %p295 = scmp.lt.s32.totalorder %s18, 2
      // Predicated region
      $region41: #{maskprednet_forward.1} parent=5 // pred_check
        %p296 = pneg %p295
      $region42: #{maskprednet_forward.1} parent=5 // pred_check_branch
        %298 = sbr.rel (%p296) target = $region44
      $region43: #{maskprednet_forward.1} parent=5 // pred_region
        // Predicated region
        $region45: #{maskprednet_forward.1} parent=43 // pred_check
          %p299 = pneg %p52
        $region46: #{maskprednet_forward.1} parent=43 // pred_check_branch
          %301 = sbr.rel (%p299) target = $region48
        $region47: #{maskprednet_forward.1} parent=43 // pred_region
          %s302 = smul.u32 2, %s25
          %p303 = scmp.lt.s32.totalorder %s26, 1
          %s304 = scalar_select %p303, %s26, 1
          %p305 = scmp.lt.s32.totalorder %s302, 1
          %s306 = scalar_select %p305, %s302, 1
          %s307 = smul.addr %s304, 16
          %s308 = sadd.s32 %s306, %s307
          %s309 = smul.addr %s308, 8
          %s310 = scalar_lea.vmem %s0, %s309
          %s311 = smul.u32 2, %s25
        $region48: #{maskprednet_forward.1} parent=43 // pred_fallthru
          _
        // Predicated region
        $region49: #{maskprednet_forward.1} parent=43 // pred_check
          %p312 = pneg %p78
        $region50: #{maskprednet_forward.1} parent=43 // pred_check_branch
          %314 = sbr.rel (%p312) target = $region52
        $region51: #{maskprednet_forward.1} parent=43 // pred_region
          %p315 = scmp.lt.s32.totalorder %s26, 1
          %s316 = scalar_select %p315, %s26, 1
          %s317 = smul.addr %s316, 16
          %s318 = smul.addr %s317, 8
          %s319 = scalar_lea.vmem %s1, %s318
        $region52: #{maskprednet_forward.1} parent=43 // pred_fallthru
          _
      $region44: #{maskprednet_forward.1} parent=5 // pred_fallthru
        _
      %p320 = scmp.le.s32.totalorder 1, %s18
      %p321 = scmp.lt.s32.totalorder %s18, 3
      %p322 = pnand %p320, %p321
      %p323 = pneg %p322
      // Predicated region
      $region53: #{maskprednet_forward.1} parent=5 // pred_check
        _
      $region54: #{maskprednet_forward.1} parent=5 // pred_check_branch
        %325 = sbr.rel (%p322) target = $region56
      $region55: #{maskprednet_forward.1} parent=5 // pred_region
        %s326 = ssub.s32 %s18, 1
        %s327 = smul.u32 2, %s27
        %p328 = scmp.lt.s32.totalorder %s28, 1
        %s329 = scalar_select %p328, %s28, 1
        %p330 = scmp.lt.s32.totalorder %s327, 1
        %s331 = scalar_select %p330, %s327, 1
        %s332 = smul.addr %s329, 16
        %s333 = sadd.s32 %s331, %s332
        %s334 = smul.addr %s333, 8
        %s335 = scalar_lea.vmem %s0, %s334
        %p336 = pneg %p58
        %p337 = pneg %p55
        %p338 = scmp.lt.s32.totalorder %s28, 1
        %s339 = scalar_select %p338, %s28, 1
        %s340 = smul.addr %s339, 16
        %s341 = smul.addr %s340, 8
        %s342 = scalar_lea.vmem %s1, %s341
        %p343 = pneg %p84
        %p344 = pneg %p81
        %p345 = pneg %p105
        %p346 = pneg %p102
        %p347 = pneg %p126
        %p348 = pneg %p123
        %p349 = pneg %p147
        %p350 = pneg %p144
        %p351 = pneg %p168
        %p352 = pneg %p165
        %p353 = pneg %p189
        %p354 = pneg %p186
        %p355 = pneg %p210
        %p356 = pneg %p207
        %p357 = pneg %p231
        %p358 = pneg %p228
        %p359 = pneg %p259
        %p360 = pneg %p256
        %s361 = sand.u32 %s246, 1
        %s362 = scalar_lea.sflag [#allocation3], %s361
        %s363 = sand.u32 %s246, 1
        %s364 = smul.addr %s363, 4
        %s365 = scalar_lea.vmem [#allocation2], %s364
        %s366 = smul.u32 2, %s27
        %p367 = scmp.lt.s32.totalorder %s28, 1
        %s368 = scalar_select %p367, %s28, 1
        %p369 = scmp.lt.s32.totalorder %s366, 1
        %s370 = scalar_select %p369, %s366, 1
        %s371 = smul.addr %s368, 16
        %s372 = sadd.s32 %s370, %s371
        %s373 = smul.addr %s372, 8
        %s374 = scalar_lea.vmem %s0, %s373
        %s375 = smul.u32 2, %s27
        %p376 = scmp.lt.s32.totalorder %s28, 1
        %s377 = scalar_select %p376, %s28, 1
        %s378 = smul.addr %s377, 16
        %s379 = smul.addr %s378, 8
        %s380 = scalar_lea.vmem %s1, %s379
        %s381 = smul.u32 2, %s27
        %v383 = vld [vmem:[%s2] sm:$0xf]
        %v384 = vld [vmem:[%s2 + $0x4] sm:$0xf]
        %v385 = vld [vmem:[%s2 + $0x8] sm:$0xf]
        %v386 = vld [vmem:[%s2 + $0xc] sm:$0xf]
        %v387 = vld [vmem:[%s2 + $0x10] sm:$0xf]
        %v388 = vld [vmem:[%s2 + $0x14] sm:$0xf]
        %v389 = vld [vmem:[%s2 + $0x18] sm:$0xf]
        %v390 = vld [vmem:[%s2 + $0x1c] sm:$0xf]
        %v391 = vld [vmem:[%s2 + $0x20] sm:$0xf]
        %v392 = vld [vmem:[%s2 + $0x24] sm:$0xf]
        %v393 = vld [vmem:[%s2 + $0x28] sm:$0xf]
        %v394 = vld [vmem:[%s2 + $0x2c] sm:$0xf]
        %v395 = vld [vmem:[%s2 + $0x30] sm:$0xf]
        %v396 = vld [vmem:[%s2 + $0x34] sm:$0xf]
        %v397 = vld [vmem:[%s2 + $0x38] sm:$0xf]
        %v398 = vld [vmem:[%s2 + $0x3c] sm:$0xf]
        %v399 = vld [vmem:[%s3] sm:$0xf]
        %v400 = vld [vmem:[%s3 + $0x4] sm:$0xf]
        %v401 = vld [vmem:[%s3 + $0x8] sm:$0xf]
        %v402 = vld [vmem:[%s3 + $0xc] sm:$0xf]
        %v403 = vld [vmem:[%s3 + $0x10] sm:$0xf]
        %v404 = vld [vmem:[%s3 + $0x14] sm:$0xf]
        %v405 = vld [vmem:[%s3 + $0x18] sm:$0xf]
        %v406 = vld [vmem:[%s3 + $0x1c] sm:$0xf]
        %v407 = vld [vmem:[%s5] sm:$0xf]
        %v408 = vld [vmem:[%s5 + $0x4] sm:$0xf]
        %v409 = vld [vmem:[%s5 + $0x8] sm:$0xf]
        %v410 = vld [vmem:[%s5 + $0xc] sm:$0xf]
        %v411 = vld [vmem:[%s7] sm:$0x1]
        %v412 = vld [vmem:[%s4] sm:$0xff]
        %v413 = vld [vmem:[%s4 + $0x8] sm:$0xff]
        %v414 = vld [vmem:[%s4 + $0x10] sm:$0xff]
        %v415 = vld [vmem:[%s4 + $0x18] sm:$0xff]
        %v416 = vld [vmem:[%s4 + $0x20] sm:$0xff]
        %v417 = vld [vmem:[%s4 + $0x28] sm:$0xff]
        %v418 = vld [vmem:[%s4 + $0x30] sm:$0xff]
        %v419 = vld [vmem:[%s4 + $0x38] sm:$0xff]
        %v420 = vld [vmem:[%s6] sm:$0xff]
        %v421 = vld [vmem:[%s6 + $0x8] sm:$0xff]
        %v422 = vld [vmem:[%s6 + $0x10] sm:$0xff]
        %v423 = vld [vmem:[%s6 + $0x18] sm:$0xff]
        %v424 = vld [vmem:[%s8] sm:$0x3]
        %v425 = vld [vmem:[%s374] sm:$0xff]
        %v426 = vld [vmem:[%s374 + $0x8] sm:$0xff]
        %v427 = vld [vmem:[%s374 + $0x10] sm:$0xff]
        %v428 = vld [vmem:[%s374 + $0x18] sm:$0xff]
        %v429 = vld [vmem:[%s374 + $0x20] sm:$0xff]
        %v430 = vld [vmem:[%s374 + $0x28] sm:$0xff]
        %v431 = vld [vmem:[%s374 + $0x30] sm:$0xff]
        %v432 = vld [vmem:[%s374 + $0x38] sm:$0xff]
        %v433 = vld [vmem:[%s374 + $0x40] sm:$0xff]
        %v434 = vld [vmem:[%s374 + $0x48] sm:$0xff]
        %v435 = vld [vmem:[%s374 + $0x50] sm:$0xff]
        %v436 = vld [vmem:[%s374 + $0x58] sm:$0xff]
        %v437 = vld [vmem:[%s374 + $0x60] sm:$0xff]
        %v438 = vld [vmem:[%s374 + $0x68] sm:$0xff]
        %v439 = vld [vmem:[%s374 + $0x70] sm:$0xff]
        %v440 = vld [vmem:[%s374 + $0x78] sm:$0xff]
        %v441 = vpack.c.bf16 %v427, %v425
        %v442 = vpack.c.bf16 %v428, %v426
        %v443 = vpack.c.bf16 %v431, %v429
        %v444 = vpack.c.bf16 %v432, %v430
        %v445 = vpack.c.bf16 %v435, %v433
        %v446 = vpack.c.bf16 %v436, %v434
        %v447 = vpack.c.bf16 %v439, %v437
        %v448 = vpack.c.bf16 %v440, %v438
        %v449 = vld [vmem:[%s380] sm:$0xff]
        %v450 = vld [vmem:[%s380 + $0x8] sm:$0xff]
        %v451 = vld [vmem:[%s380 + $0x10] sm:$0xff]
        %v452 = vld [vmem:[%s380 + $0x18] sm:$0xff]
        %v453 = vld [vmem:[%s380 + $0x20] sm:$0xff]
        %v454 = vld [vmem:[%s380 + $0x28] sm:$0xff]
        %v455 = vld [vmem:[%s380 + $0x30] sm:$0xff]
        %v456 = vld [vmem:[%s380 + $0x38] sm:$0xff]
        %v457 = vld [vmem:[%s380 + $0x40] sm:$0xff]
        %v458 = vld [vmem:[%s380 + $0x48] sm:$0xff]
        %v459 = vld [vmem:[%s380 + $0x50] sm:$0xff]
        %v460 = vld [vmem:[%s380 + $0x58] sm:$0xff]
        %v461 = vld [vmem:[%s380 + $0x60] sm:$0xff]
        %v462 = vld [vmem:[%s380 + $0x68] sm:$0xff]
        %v463 = vld [vmem:[%s380 + $0x70] sm:$0xff]
        %v464 = vld [vmem:[%s380 + $0x78] sm:$0xff]
        %466 = vset.pattern.permute.xlu0 0
        %467 = vperm.xlu0 %466, %v449
        %v468 = vpop.permute.xlu0 %467
        %471 = vset.pattern.permute.xlu0 0
        %472 = vperm.xlu0 %471, %v450
        %v473 = vpop.permute.xlu0 %472
        %476 = vset.pattern.permute.xlu0 0
        %477 = vperm.xlu0 %476, %v451
        %v478 = vpop.permute.xlu0 %477
        %481 = vset.pattern.permute.xlu0 0
        %482 = vperm.xlu0 %481, %v452
        %v483 = vpop.permute.xlu0 %482
        %486 = vset.pattern.permute.xlu0 0
        %487 = vperm.xlu0 %486, %v453
        %v488 = vpop.permute.xlu0 %487
        %491 = vset.pattern.permute.xlu0 0
        %492 = vperm.xlu0 %491, %v454
        %v493 = vpop.permute.xlu0 %492
        %496 = vset.pattern.permute.xlu0 0
        %497 = vperm.xlu0 %496, %v455
        %v498 = vpop.permute.xlu0 %497
        %501 = vset.pattern.permute.xlu0 0
        %502 = vperm.xlu0 %501, %v456
        %v503 = vpop.permute.xlu0 %502
        %506 = vset.pattern.permute.xlu0 0
        %507 = vperm.xlu0 %506, %v457
        %v508 = vpop.permute.xlu0 %507
        %511 = vset.pattern.permute.xlu0 0
        %512 = vperm.xlu0 %511, %v458
        %v513 = vpop.permute.xlu0 %512
        %516 = vset.pattern.permute.xlu0 0
        %517 = vperm.xlu0 %516, %v459
        %v518 = vpop.permute.xlu0 %517
        %521 = vset.pattern.permute.xlu0 0
        %522 = vperm.xlu0 %521, %v460
        %v523 = vpop.permute.xlu0 %522
        %526 = vset.pattern.permute.xlu0 0
        %527 = vperm.xlu0 %526, %v461
        %v528 = vpop.permute.xlu0 %527
        %531 = vset.pattern.permute.xlu0 0
        %532 = vperm.xlu0 %531, %v462
        %v533 = vpop.permute.xlu0 %532
        %536 = vset.pattern.permute.xlu0 0
        %537 = vperm.xlu0 %536, %v463
        %v538 = vpop.permute.xlu0 %537
        %541 = vset.pattern.permute.xlu0 0
        %542 = vperm.xlu0 %541, %v464
        %v543 = vpop.permute.xlu0 %542
        %v561 = vunpack.c.l.b16 %v383
        %v562 = vunpack.c.l.b16 %v384
        %v563 = vunpack.c.l.b16 %v385
        %v564 = vunpack.c.l.b16 %v386
        %v565 = vunpack.c.l.b16 %v387
        %v566 = vunpack.c.l.b16 %v388
        %v567 = vunpack.c.l.b16 %v389
        %v568 = vunpack.c.l.b16 %v390
        %v569 = vunpack.c.l.b16 %v391
        %v570 = vunpack.c.l.b16 %v392
        %v571 = vunpack.c.l.b16 %v393
        %v572 = vunpack.c.l.b16 %v394
        %v573 = vunpack.c.l.b16 %v395
        %v574 = vunpack.c.l.b16 %v396
        %v575 = vunpack.c.l.b16 %v397
        %v576 = vunpack.c.l.b16 %v398
        %v577 = vpack.c.b16 %v562, %v561
        %v578 = vpack.c.b16 %v564, %v563
        %v579 = vpack.c.b16 %v566, %v565
        %v580 = vpack.c.b16 %v568, %v567
        %v581 = vpack.c.b16 %v570, %v569
        %v582 = vpack.c.b16 %v572, %v571
        %v583 = vpack.c.b16 %v574, %v573
        %v584 = vpack.c.b16 %v576, %v575
        %vm585 = vcmask 523264
        %v587 = vsel %vm585, %v577, 0
        %v590 = vsel %vm585, %v578, 0
        %v593 = vsel %vm585, %v579, 0
        %v596 = vsel %vm585, %v580, 0
        %v599 = vsel %vm585, %v581, 0
        %v602 = vsel %vm585, %v582, 0
        %v605 = vsel %vm585, %v583, 0
        %v608 = vsel %vm585, %v584, 0
        %610 = vmatprep.subr.bf16.mxu0 0
        %611 = vmatpush1.bf16.msra.mxu0 0
        %612 = vmatprep.subr.bf16.mxu0 0
        %613 = vmatpush1.bf16.msra.mxu0 0
        %614 = vmatprep.subr.bf16.mxu0 0
        %615 = vmatpush1.bf16.msra.mxu0 0
        %616 = vmatprep.subr.bf16.mxu0 0
        %617 = vmatpush1.bf16.msra.mxu0 0
        %618 = vmatprep.subr.bf16.mxu0 %v448
        %619 = vmatpush1.bf16.msra.mxu0 %v447
        %620 = vmatprep.subr.bf16.mxu0 %v446
        %621 = vmatpush1.bf16.msra.mxu0 %v445
        %622 = vmatprep.subr.bf16.mxu0 %v444
        %623 = vmatpush1.bf16.msra.mxu0 %v443
        %624 = vmatprep.subr.bf16.mxu0 %v442
        %625 = vmatpush1.bf16.msra.mxu0 %v441
        %626 = vmatprep.subr.bf16.mxu0 0
        %627 = vmatpush2.bf16.msra.mxu0 0
        %628 = vmatprep.subr.bf16.mxu0 0
        %629 = vmatpush2.bf16.msra.mxu0 0
        %630 = vmatprep.subr.bf16.mxu0 0
        %631 = vmatpush2.bf16.msra.mxu0 0
        %632 = vmatprep.subr.bf16.mxu0 0
        %633 = vmatpush2.bf16.msra.mxu0 0
        %634 = vmatprep.subr.bf16.mxu0 0
        %635 = vmatpush2.bf16.msra.mxu0 0
        %636 = vmatprep.subr.bf16.mxu0 0
        %637 = vmatpush2.bf16.msra.mxu0 0
        %638 = vmatprep.subr.bf16.mxu0 0
        %639 = vmatpush2.bf16.msra.mxu0 0
        %640 = vmatprep.subr.bf16.mxu0 0
        %641 = vmatpush2.bf16.msra.mxu0 0
        %642 = vmatprep.mubr.bf16.mxu0 0
        %643 = vmatmul.mubr.bf16.gmra.mxu0 %v587
        %v644 = vpop.f32.mrf.mxu0
        %v645 = vadd.f32 %v468, %v644
        %v646 = vpop.f32.mrf.mxu0
        %v647 = vadd.f32 %v468, %v646
        %v648 = vpop.f32.mrf.mxu0
        %v649 = vadd.f32 %v473, %v648
        %v650 = vpop.f32.mrf.mxu0
        %v651 = vadd.f32 %v473, %v650
        %652 = vmatprep.mubr.bf16.mxu0 0
        %653 = vmatmul.mubr.bf16.gmra.mxu0 %v590
        %v654 = vpop.f32.mrf.mxu0
        %v655 = vadd.f32 %v478, %v654
        %v656 = vpop.f32.mrf.mxu0
        %v657 = vadd.f32 %v478, %v656
        %v658 = vpop.f32.mrf.mxu0
        %v659 = vadd.f32 %v483, %v658
        %v660 = vpop.f32.mrf.mxu0
        %v661 = vadd.f32 %v483, %v660
        %662 = vmatprep.mubr.bf16.mxu0 0
        %663 = vmatmul.mubr.bf16.gmra.mxu0 %v593
        %v664 = vpop.f32.mrf.mxu0
        %v665 = vadd.f32 %v488, %v664
        %v666 = vpop.f32.mrf.mxu0
        %v667 = vadd.f32 %v488, %v666
        %v668 = vpop.f32.mrf.mxu0
        %v669 = vadd.f32 %v493, %v668
        %v670 = vpop.f32.mrf.mxu0
        %v671 = vadd.f32 %v493, %v670
        %672 = vmatprep.mubr.bf16.mxu0 0
        %673 = vmatmul.mubr.bf16.gmra.mxu0 %v596
        %v674 = vpop.f32.mrf.mxu0
        %v675 = vadd.f32 %v498, %v674
        %v676 = vpop.f32.mrf.mxu0
        %v677 = vadd.f32 %v498, %v676
        %v678 = vpop.f32.mrf.mxu0
        %v679 = vadd.f32 %v503, %v678
        %v680 = vpop.f32.mrf.mxu0
        %v681 = vadd.f32 %v503, %v680
        %682 = vmatprep.mubr.bf16.mxu0 0
        %683 = vmatmul.mubr.bf16.gmra.mxu0 %v599
        %v684 = vpop.f32.mrf.mxu0
        %v685 = vadd.f32 %v508, %v684
        %v686 = vpop.f32.mrf.mxu0
        %v687 = vadd.f32 %v508, %v686
        %v688 = vpop.f32.mrf.mxu0
        %v689 = vadd.f32 %v513, %v688
        %v690 = vpop.f32.mrf.mxu0
        %v691 = vadd.f32 %v513, %v690
        %692 = vmatprep.mubr.bf16.mxu0 0
        %693 = vmatmul.mubr.bf16.gmra.mxu0 %v602
        %v694 = vpop.f32.mrf.mxu0
        %v695 = vadd.f32 %v518, %v694
        %v696 = vpop.f32.mrf.mxu0
        %v697 = vadd.f32 %v518, %v696
        %v698 = vpop.f32.mrf.mxu0
        %v699 = vadd.f32 %v523, %v698
        %v700 = vpop.f32.mrf.mxu0
        %v701 = vadd.f32 %v523, %v700
        %702 = vmatprep.mubr.bf16.mxu0 0
        %703 = vmatmul.mubr.bf16.gmra.mxu0 %v605
        %v704 = vpop.f32.mrf.mxu0
        %v705 = vadd.f32 %v528, %v704
        %v706 = vpop.f32.mrf.mxu0
        %v707 = vadd.f32 %v528, %v706
        %v708 = vpop.f32.mrf.mxu0
        %v709 = vadd.f32 %v533, %v708
        %v710 = vpop.f32.mrf.mxu0
        %v711 = vadd.f32 %v533, %v710
        %712 = vmatprep.mubr.bf16.mxu0 0
        %713 = vmatmul.mubr.bf16.gmra.mxu0 %v608
        %v714 = vpop.f32.mrf.mxu0
        %v715 = vadd.f32 %v538, %v714
        %v716 = vpop.f32.mrf.mxu0
        %v717 = vadd.f32 %v538, %v716
        %v718 = vpop.f32.mrf.mxu0
        %v719 = vadd.f32 %v543, %v718
        %v720 = vpop.f32.mrf.mxu0
        %v721 = vadd.f32 %v543, %v720
        %722 = vdwg.mxu0
        %v723 = vmax.f32 %v645, 0.0
        %v724 = vmax.f32 %v647, 0.0
        %v725 = vmax.f32 %v649, 0.0
        %v726 = vmax.f32 %v651, 0.0
        %v727 = vmax.f32 %v655, 0.0
        %v728 = vmax.f32 %v657, 0.0
        %v729 = vmax.f32 %v659, 0.0
        %v730 = vmax.f32 %v661, 0.0
        %v731 = vmax.f32 %v665, 0.0
        %v732 = vmax.f32 %v667, 0.0
        %v733 = vmax.f32 %v669, 0.0
        %v734 = vmax.f32 %v671, 0.0
        %v735 = vmax.f32 %v675, 0.0
        %v736 = vmax.f32 %v677, 0.0
        %v737 = vmax.f32 %v679, 0.0
        %v738 = vmax.f32 %v681, 0.0
        %v739 = vmax.f32 %v685, 0.0
        %v740 = vmax.f32 %v687, 0.0
        %v741 = vmax.f32 %v689, 0.0
        %v742 = vmax.f32 %v691, 0.0
        %v743 = vmax.f32 %v695, 0.0
        %v744 = vmax.f32 %v697, 0.0
        %v745 = vmax.f32 %v699, 0.0
        %v746 = vmax.f32 %v701, 0.0
        %v747 = vmax.f32 %v705, 0.0
        %v748 = vmax.f32 %v707, 0.0
        %v749 = vmax.f32 %v709, 0.0
        %v750 = vmax.f32 %v711, 0.0
        %v751 = vmax.f32 %v715, 0.0
        %v752 = vmax.f32 %v717, 0.0
        %v753 = vmax.f32 %v719, 0.0
        %v754 = vmax.f32 %v721, 0.0
        %v755 = vpack.c.bf16 %v725, %v723
        %v756 = vpack.c.bf16 %v726, %v724
        %v757 = vpack.c.bf16 %v729, %v727
        %v758 = vpack.c.bf16 %v730, %v728
        %v759 = vpack.c.bf16 %v733, %v731
        %v760 = vpack.c.bf16 %v734, %v732
        %v761 = vpack.c.bf16 %v737, %v735
        %v762 = vpack.c.bf16 %v738, %v736
        %v763 = vpack.c.bf16 %v741, %v739
        %v764 = vpack.c.bf16 %v742, %v740
        %v765 = vpack.c.bf16 %v745, %v743
        %v766 = vpack.c.bf16 %v746, %v744
        %v767 = vpack.c.bf16 %v749, %v747
        %v768 = vpack.c.bf16 %v750, %v748
        %v769 = vpack.c.bf16 %v753, %v751
        %v770 = vpack.c.bf16 %v754, %v752
        %772 = vset.pattern.permute.xlu0 0
        %773 = vperm.xlu0 %772, %v412
        %v774 = vpop.permute.xlu0 %773
        %777 = vset.pattern.permute.xlu0 0
        %778 = vperm.xlu0 %777, %v413
        %v779 = vpop.permute.xlu0 %778
        %782 = vset.pattern.permute.xlu0 0
        %783 = vperm.xlu0 %782, %v414
        %v784 = vpop.permute.xlu0 %783
        %787 = vset.pattern.permute.xlu0 0
        %788 = vperm.xlu0 %787, %v415
        %v789 = vpop.permute.xlu0 %788
        %792 = vset.pattern.permute.xlu0 0
        %793 = vperm.xlu0 %792, %v416
        %v794 = vpop.permute.xlu0 %793
        %797 = vset.pattern.permute.xlu0 0
        %798 = vperm.xlu0 %797, %v417
        %v799 = vpop.permute.xlu0 %798
        %802 = vset.pattern.permute.xlu0 0
        %803 = vperm.xlu0 %802, %v418
        %v804 = vpop.permute.xlu0 %803
        %807 = vset.pattern.permute.xlu0 0
        %808 = vperm.xlu0 %807, %v419
        %v809 = vpop.permute.xlu0 %808
        %v819 = vunpack.c.l.b16 %v399
        %v820 = vunpack.c.l.b16 %v400
        %v821 = vunpack.c.l.b16 %v401
        %v822 = vunpack.c.l.b16 %v402
        %v823 = vunpack.c.l.b16 %v403
        %v824 = vunpack.c.l.b16 %v404
        %v825 = vunpack.c.l.b16 %v405
        %v826 = vunpack.c.l.b16 %v406
        %v827 = vpack.c.b16 %v820, %v819
        %v828 = vpack.c.b16 %v822, %v821
        %v829 = vpack.c.b16 %v824, %v823
        %v830 = vpack.c.b16 %v826, %v825
        %835 = vmatprep.subr.bf16.mxu0 %v770
        %836 = vmatpush1.bf16.msra.mxu0 %v769
        %837 = vmatprep.subr.bf16.mxu0 %v768
        %838 = vmatpush1.bf16.msra.mxu0 %v767
        %839 = vmatprep.subr.bf16.mxu0 %v766
        %840 = vmatpush1.bf16.msra.mxu0 %v765
        %841 = vmatprep.subr.bf16.mxu0 %v764
        %842 = vmatpush1.bf16.msra.mxu0 %v763
        %843 = vmatprep.subr.bf16.mxu0 %v762
        %844 = vmatpush1.bf16.msra.mxu0 %v761
        %845 = vmatprep.subr.bf16.mxu0 %v760
        %846 = vmatpush1.bf16.msra.mxu0 %v759
        %847 = vmatprep.subr.bf16.mxu0 %v758
        %848 = vmatpush1.bf16.msra.mxu0 %v757
        %849 = vmatprep.subr.bf16.mxu0 %v756
        %850 = vmatpush1.bf16.msra.mxu0 %v755
        %851 = vmatprep.subr.bf16.mxu0 0
        %852 = vmatpush2.bf16.msra.mxu0 0
        %853 = vmatprep.subr.bf16.mxu0 0
        %854 = vmatpush2.bf16.msra.mxu0 0
        %855 = vmatprep.subr.bf16.mxu0 0
        %856 = vmatpush2.bf16.msra.mxu0 0
        %857 = vmatprep.subr.bf16.mxu0 0
        %858 = vmatpush2.bf16.msra.mxu0 0
        %859 = vmatprep.subr.bf16.mxu0 0
        %860 = vmatpush2.bf16.msra.mxu0 0
        %861 = vmatprep.subr.bf16.mxu0 0
        %862 = vmatpush2.bf16.msra.mxu0 0
        %863 = vmatprep.subr.bf16.mxu0 0
        %864 = vmatpush2.bf16.msra.mxu0 0
        %865 = vmatprep.subr.bf16.mxu0 0
        %866 = vmatpush2.bf16.msra.mxu0 0
        %867 = vmatprep.mubr.bf16.mxu0 0
        %868 = vmatmul.mubr.bf16.gmra.mxu0 %v827
        %v869 = vpop.f32.mrf.mxu0
        %v870 = vadd.f32 %v774, %v869
        %v871 = vpop.f32.mrf.mxu0
        %v872 = vadd.f32 %v774, %v871
        %v873 = vpop.f32.mrf.mxu0
        %v874 = vadd.f32 %v779, %v873
        %v875 = vpop.f32.mrf.mxu0
        %v876 = vadd.f32 %v779, %v875
        %877 = vmatprep.mubr.bf16.mxu0 0
        %878 = vmatmul.mubr.bf16.gmra.mxu0 %v828
        %v879 = vpop.f32.mrf.mxu0
        %v880 = vadd.f32 %v784, %v879
        %v881 = vpop.f32.mrf.mxu0
        %v882 = vadd.f32 %v784, %v881
        %v883 = vpop.f32.mrf.mxu0
        %v884 = vadd.f32 %v789, %v883
        %v885 = vpop.f32.mrf.mxu0
        %v886 = vadd.f32 %v789, %v885
        %887 = vmatprep.mubr.bf16.mxu0 0
        %888 = vmatmul.mubr.bf16.gmra.mxu0 %v829
        %v889 = vpop.f32.mrf.mxu0
        %v890 = vadd.f32 %v794, %v889
        %v891 = vpop.f32.mrf.mxu0
        %v892 = vadd.f32 %v794, %v891
        %v893 = vpop.f32.mrf.mxu0
        %v894 = vadd.f32 %v799, %v893
        %v895 = vpop.f32.mrf.mxu0
        %v896 = vadd.f32 %v799, %v895
        %897 = vmatprep.mubr.bf16.mxu0 0
        %898 = vmatmul.mubr.bf16.gmra.mxu0 %v830
        %v899 = vpop.f32.mrf.mxu0
        %v900 = vadd.f32 %v804, %v899
        %v901 = vpop.f32.mrf.mxu0
        %v902 = vadd.f32 %v804, %v901
        %v903 = vpop.f32.mrf.mxu0
        %v904 = vadd.f32 %v809, %v903
        %v905 = vpop.f32.mrf.mxu0
        %v906 = vadd.f32 %v809, %v905
        %907 = vdwg.mxu0
        %v908 = vmax.f32 %v870, 0.0
        %v909 = vmax.f32 %v872, 0.0
        %v910 = vmax.f32 %v874, 0.0
        %v911 = vmax.f32 %v876, 0.0
        %v912 = vmax.f32 %v880, 0.0
        %v913 = vmax.f32 %v882, 0.0
        %v914 = vmax.f32 %v884, 0.0
        %v915 = vmax.f32 %v886, 0.0
        %v916 = vmax.f32 %v890, 0.0
        %v917 = vmax.f32 %v892, 0.0
        %v918 = vmax.f32 %v894, 0.0
        %v919 = vmax.f32 %v896, 0.0
        %v920 = vmax.f32 %v900, 0.0
        %v921 = vmax.f32 %v902, 0.0
        %v922 = vmax.f32 %v904, 0.0
        %v923 = vmax.f32 %v906, 0.0
        %v924 = vpack.c.bf16 %v910, %v908
        %v925 = vpack.c.bf16 %v911, %v909
        %v926 = vpack.c.bf16 %v914, %v912
        %v927 = vpack.c.bf16 %v915, %v913
        %v928 = vpack.c.bf16 %v918, %v916
        %v929 = vpack.c.bf16 %v919, %v917
        %v930 = vpack.c.bf16 %v922, %v920
        %v931 = vpack.c.bf16 %v923, %v921
        %933 = vset.pattern.permute.xlu0 0
        %934 = vperm.xlu0 %933, %v420
        %v935 = vpop.permute.xlu0 %934
        %938 = vset.pattern.permute.xlu0 0
        %939 = vperm.xlu0 %938, %v421
        %v940 = vpop.permute.xlu0 %939
        %943 = vset.pattern.permute.xlu0 0
        %944 = vperm.xlu0 %943, %v422
        %v945 = vpop.permute.xlu0 %944
        %948 = vset.pattern.permute.xlu0 0
        %949 = vperm.xlu0 %948, %v423
        %v950 = vpop.permute.xlu0 %949
        %v956 = vunpack.c.l.b16 %v407
        %v957 = vunpack.c.l.b16 %v408
        %v958 = vunpack.c.l.b16 %v409
        %v959 = vunpack.c.l.b16 %v410
        %v960 = vpack.c.b16 %v957, %v956
        %v961 = vpack.c.b16 %v959, %v958
        %v963 = vsel %vm585, %v960, 0
        %v966 = vsel %vm585, %v961, 0
        %968 = vmatprep.subr.bf16.mxu0 0
        %969 = vmatpush1.bf16.msra.mxu0 0
        %970 = vmatprep.subr.bf16.mxu0 0
        %971 = vmatpush1.bf16.msra.mxu0 0
        %972 = vmatprep.subr.bf16.mxu0 0
        %973 = vmatpush1.bf16.msra.mxu0 0
        %974 = vmatprep.subr.bf16.mxu0 0
        %975 = vmatpush1.bf16.msra.mxu0 0
        %976 = vmatprep.subr.bf16.mxu0 %v931
        %977 = vmatpush1.bf16.msra.mxu0 %v930
        %978 = vmatprep.subr.bf16.mxu0 %v929
        %979 = vmatpush1.bf16.msra.mxu0 %v928
        %980 = vmatprep.subr.bf16.mxu0 %v927
        %981 = vmatpush1.bf16.msra.mxu0 %v926
        %982 = vmatprep.subr.bf16.mxu0 %v925
        %983 = vmatpush1.bf16.msra.mxu0 %v924
        %984 = vmatprep.subr.bf16.mxu0 0
        %985 = vmatpush2.bf16.msra.mxu0 0
        %986 = vmatprep.subr.bf16.mxu0 0
        %987 = vmatpush2.bf16.msra.mxu0 0
        %988 = vmatprep.subr.bf16.mxu0 0
        %989 = vmatpush2.bf16.msra.mxu0 0
        %990 = vmatprep.subr.bf16.mxu0 0
        %991 = vmatpush2.bf16.msra.mxu0 0
        %992 = vmatprep.subr.bf16.mxu0 0
        %993 = vmatpush2.bf16.msra.mxu0 0
        %994 = vmatprep.subr.bf16.mxu0 0
        %995 = vmatpush2.bf16.msra.mxu0 0
        %996 = vmatprep.subr.bf16.mxu0 0
        %997 = vmatpush2.bf16.msra.mxu0 0
        %998 = vmatprep.subr.bf16.mxu0 0
        %999 = vmatpush2.bf16.msra.mxu0 0
        %1000 = vmatprep.mubr.bf16.mxu0 0
        %1001 = vmatmul.mubr.bf16.gmra.mxu0 %v963
        %v1002 = vpop.f32.mrf.mxu0
        %v1003 = vadd.f32 %v935, %v1002
        %v1004 = vpop.f32.mrf.mxu0
        %v1005 = vadd.f32 %v935, %v1004
        %v1006 = vpop.f32.mrf.mxu0
        %v1007 = vadd.f32 %v940, %v1006
        %v1008 = vpop.f32.mrf.mxu0
        %v1009 = vadd.f32 %v940, %v1008
        %1010 = vmatprep.mubr.bf16.mxu0 0
        %1011 = vmatmul.mubr.bf16.gmra.mxu0 %v966
        %v1012 = vpop.f32.mrf.mxu0
        %v1013 = vadd.f32 %v945, %v1012
        %v1014 = vpop.f32.mrf.mxu0
        %v1015 = vadd.f32 %v945, %v1014
        %v1016 = vpop.f32.mrf.mxu0
        %v1017 = vadd.f32 %v950, %v1016
        %v1018 = vpop.f32.mrf.mxu0
        %v1019 = vadd.f32 %v950, %v1018
        %1020 = vdwg.mxu0
        %v1021 = vmax.f32 %v1003, 0.0
        %v1022 = vmax.f32 %v1005, 0.0
        %v1023 = vmax.f32 %v1007, 0.0
        %v1024 = vmax.f32 %v1009, 0.0
        %v1025 = vmax.f32 %v1013, 0.0
        %v1026 = vmax.f32 %v1015, 0.0
        %v1027 = vmax.f32 %v1017, 0.0
        %v1028 = vmax.f32 %v1019, 0.0
        %v1029 = vpack.c.bf16 %v1023, %v1021
        %v1030 = vpack.c.bf16 %v1024, %v1022
        %v1031 = vpack.c.bf16 %v1027, %v1025
        %v1032 = vpack.c.bf16 %v1028, %v1026
        %1034 = vset.pattern.permute.xlu0 0
        %1035 = vperm.xlu0 %1034, %v424
        %v1036 = vpop.permute.xlu0 %1035
        %vm1038 = vcmask 261120
        %v1040 = vsel %vm1038, %v411, 0
        %1042 = vmatprep.subr.bf16.mxu0 0
        %1043 = vmatpush1.bf16.msra.mxu0 0
        %1044 = vmatprep.subr.bf16.mxu0 0
        %1045 = vmatpush1.bf16.msra.mxu0 0
        %1046 = vmatprep.subr.bf16.mxu0 0
        %1047 = vmatpush1.bf16.msra.mxu0 0
        %1048 = vmatprep.subr.bf16.mxu0 0
        %1049 = vmatpush1.bf16.msra.mxu0 0
        %1050 = vmatprep.subr.bf16.mxu0 0
        %1051 = vmatpush1.bf16.msra.mxu0 0
        %1052 = vmatprep.subr.bf16.mxu0 0
        %1053 = vmatpush1.bf16.msra.mxu0 0
        %1054 = vmatprep.subr.bf16.mxu0 %v1032
        %1055 = vmatpush1.bf16.msra.mxu0 %v1031
        %1056 = vmatprep.subr.bf16.mxu0 %v1030
        %1057 = vmatpush1.bf16.msra.mxu0 %v1029
        %1058 = vmatprep.subr.bf16.mxu0 0
        %1059 = vmatpush2.bf16.msra.mxu0 0
        %1060 = vmatprep.subr.bf16.mxu0 0
        %1061 = vmatpush2.bf16.msra.mxu0 0
        %1062 = vmatprep.subr.bf16.mxu0 0
        %1063 = vmatpush2.bf16.msra.mxu0 0
        %1064 = vmatprep.subr.bf16.mxu0 0
        %1065 = vmatpush2.bf16.msra.mxu0 0
        %1066 = vmatprep.subr.bf16.mxu0 0
        %1067 = vmatpush2.bf16.msra.mxu0 0
        %1068 = vmatprep.subr.bf16.mxu0 0
        %1069 = vmatpush2.bf16.msra.mxu0 0
        %1070 = vmatprep.subr.bf16.mxu0 0
        %1071 = vmatpush2.bf16.msra.mxu0 0
        %1072 = vmatprep.subr.bf16.mxu0 0
        %1073 = vmatpush2.bf16.msra.mxu0 0
        %1074 = vmatprep.mubr.bf16.mxu0 0
        %1075 = vmatmul.mubr.bf16.gmra.mxu0 %v1040
        %v1076 = vpop.f32.mrf.mxu0
        %v1077 = vadd.f32 %v1036, %v1076
        %v1078 = vpop.f32.mrf.mxu0
        %v1079 = vadd.f32 %v1036, %v1078
        %v1080 = vpop.f32.mrf.mxu0
        %v1081 = vpop.f32.mrf.mxu0
        %1082 = vdwg.mxu0
        %v1085 = vrot.slane %v1077, 1
        %v1086 = vrot.slane %v1079, 1
        %v1089 = vmax.f32 %v1077, %v1085
        %v1090 = vmax.f32 %v1079, %v1086
        %v1091 = vsub.f32 %v1077, %v1085
        %v1092 = vsub.f32 %v1079, %v1086
        %v1093 = vand.u32 2147483647, %v1091
        %v1094 = vand.u32 2147483647, %v1092
        %v1095 = vsub.f32 0.0, %v1093
        %v1096 = vsub.f32 0.0, %v1094
        %v1097 = vmul.f32 %v1095, 1.442695
        %v1098 = vpow.pop %v1097
        %v1099 = vmul.f32 %v1096, 1.442695
        %v1100 = vpow.pop %v1099
        %v1101 = vadd.f32 %v1098, 1.0
        %v1102 = vadd.f32 %v1100, 1.0
        %v1103 = vlog2.pop %v1101
        %v1104 = vmul.f32 %v1103, 0.6931472
        %v1105 = vlog2.pop %v1102
        %v1106 = vmul.f32 %v1105, 0.6931472
        %v1107 = vadd.f32 %v1089, %v1104
        %v1108 = vadd.f32 %v1090, %v1106
        %v1109 = vlaneseq
        %v1110 = vshrl.u32 %v1109, 7
        %v1111 = vsub.s32 0, %v1110
        %v1112 = vrot.slane %v1107, %v1111
        %v1113 = vlaneseq
        %v1114 = vshrl.u32 %v1113, 7
        %v1115 = vsub.s32 0, %v1114
        %v1116 = vrot.slane %v1108, %v1115
        %v1117 = vsub.f32 %v1077, %v1112
        %v1118 = vsub.f32 %v1079, %v1116
        %v1121 = vcombine.low %v1117, %v1118
        %v1123 = vunpack.c.l.s4 1983009808
        %v1124 = vunpack.c.0.s8 %v1123
        %v1125 = vlaneseq
        %v1126 = vshrl.u32 %v1125, 7
        %v1127 = vsub.s32 %v1124, %v1126
        %v1128 = vrot.slane %v1121, %v1127
        %1130 = vst [vmem:[%s365] sm:$0xf] %v1128
        %s1131 = sand.u32 %s246, 1
        %s1132 = scalar_lea.sflag [#allocation3], %s1131
        %s1133 = sand.u32 %s246, 1
        %s1134 = smul.addr %s1133, 4
        %s1135 = scalar_lea.vmem [#allocation2], %s1134
        // Predicated region
        $region57: #{maskprednet_forward.1} parent=55 // pred_check
          %p1136 = pneg %p256
        $region58: #{maskprednet_forward.1} parent=55 // pred_check_branch
          %1138 = sbr.rel (%p1136) target = $region60
        $region59: #{maskprednet_forward.1} parent=55 // pred_region
          %s1139 = smul.u32 2, %s27
          %s1141 = ssub.s32 64, 64
          %1142 = vsyncadd %s1132, %s1141
          %s1143 = smul.addr %s28, 2
          %s1144 = sadd.s32 %s1139, %s1143
          %s1145 = smul.addr %s1144, 32
          %s1146 = scalar_lea.hbm %s9, %s1145
          %s1148 = sshll.u32 %s1135, 4
          %s1149 = int_to_ptr.vmem [resolvable:$true] %s1148
          %1151 = dma.vmem_to_hbm [thread:$0]  %s1149, 64, %s1146, %s1132
        $region60: #{maskprednet_forward.1} parent=55 // pred_fallthru
          _
      $region56: #{maskprednet_forward.1} parent=5 // pred_fallthru
        _
      %p1152 = scmp.le.s32.totalorder 2, %s18
      // Predicated region
      $region61: #{maskprednet_forward.1} parent=5 // pred_check
        %p1153 = pneg %p1152
      $region62: #{maskprednet_forward.1} parent=5 // pred_check_branch
        %1155 = sbr.rel (%p1153) target = $region64
      $region63: #{maskprednet_forward.1} parent=5 // pred_region
        %s1156 = ssub.s32 %s18, 2
        // Predicated region
        $region65: #{maskprednet_forward.1} parent=63 // pred_check
          %p1157 = pneg %p262
        $region66: #{maskprednet_forward.1} parent=63 // pred_check_branch
          %1159 = sbr.rel (%p1157) target = $region68
        $region67: #{maskprednet_forward.1} parent=63 // pred_region
          %s1160 = sand.u32 %s247, 1
          %s1161 = scalar_lea.sflag [#allocation3], %s1160
          %s1162 = sand.u32 %s247, 1
          %s1163 = smul.addr %s1162, 4
          %s1164 = scalar_lea.vmem [#allocation2], %s1163
          %1165 = dma.done %s1161, 64
        $region68: #{maskprednet_forward.1} parent=63 // pred_fallthru
          _
      $region64: #{maskprednet_forward.1} parent=5 // pred_fallthru
        _
    $region6: #{maskprednet_forward.1} parent=1 // loop_footer
      %s22 = sadd.s32 1, %s18
    $region7: #{maskprednet_forward.1} parent=1 // loop_footer_branch
      %17 = sbr.rel target = $region3
    $region8: #{maskprednet_forward.1} parent=1 // loop_exit
      _
    %1166 = vsyncpa [#allocation3], 1
    %s1167 = scalar_lea.sflag [#allocation3], 1
    %1168 = vsyncpa %s1167, 1

</llo_original>
